<compile_context>
chip_gen: v6e
topology: v6e:2x2x1
jax: 0.10.0
libtpu: 0.0.40
codegen_flags: <defaults>
</compile_context>

<pallas_src>
import jax
import jax.numpy as jnp
from jax import lax
from jax.experimental import pallas as pl
from jax.experimental.pallas import tpu as pltpu


NEG_SLOPE = 0.01  # F.leaky_relu default negative_slope


def _round_up(x, m):
    return ((x + m - 1) // m) * m


def _vmem_capacity_bytes():
    """VMEM per TensorCore (64 MiB on v7x, 128 MiB on v5e/v6e)."""
    try:
        info = pltpu.get_tpu_info()
        cap = getattr(info, "vmem_capacity_bytes", None)
        if cap:
            return int(cap)
    except Exception:
        pass
    return 64 * 1024 * 1024  # conservative (v7x-sized) fallback


def _mlp_base2_kernel(x1_ref, w1_ref, b1_ref, x2_ref, w2_ref, b2_ref,
                      o1_ref, o2_ref, acc_ref):
    """grid = (batch_blocks, hidden_blocks, k_blocks); acc accumulates over K."""
    k = pl.program_id(2)

    @pl.when(k == 0)
    def _():
        acc_ref[...] = jnp.zeros_like(acc_ref)

    # Branch 1 partial product: x1 tile (tm, tk) against PyTorch-layout weight
    # tile (tn, tk); contract both last axes -> (tm, tn), f32 accumulation.
    # TODO(synk): verify via a bundle dump that the transposed-RHS contraction
    #             does not lower to a per-K-step XLU transpose; if it does,
    #             relayout w1 to (K, H) once at parameter setup instead.
    acc_ref[...] += lax.dot_general(
        x1_ref[...], w1_ref[...],
        dimension_numbers=(((1,), (1,)), ((), ())),
        preferred_element_type=jnp.float32)

    @pl.when(k == pl.num_programs(2) - 1)
    def _():
        # Epilogue (once per (batch, hidden) tile): bias + leaky_relu, then a
        # lane-dense full-tile store of branch 1.
        h1 = acc_ref[...] + b1_ref[...]
        o1_ref[...] = jnp.maximum(h1, NEG_SLOPE * h1).astype(o1_ref.dtype)

        # Branch 2 (tiny K = input_dim2): its operands are resident across the
        # K axis, so compute it exactly once here.
        h2 = lax.dot_general(
            x2_ref[...], w2_ref[...],
            dimension_numbers=(((1,), (1,)), ((), ())),
            preferred_element_type=jnp.float32)
        h2 = h2 + b2_ref[...]
        o2_ref[...] = jnp.maximum(h2, NEG_SLOPE * h2).astype(o2_ref.dtype)


def mlp_base2_forward(x1, x2, w1, b1, w2, b2, *, use_bf16=True,
                      tm=None, tn=None, tk=None):
    """Forward pass of Mlp_Base2.

    x1: (B, *obs_shape), x2: (B, ...) -> flattened to (B, D2).
    w1: (H, flat_dim), b1: (H,), w2: (H, D2), b2: (H,)   (nn.Linear layout).
    Returns (B, 2H) = concat(leaky(x1f @ w1.T + b1), leaky(x2f @ w2.T + b2), -1).
    """
    batch = x1.shape[0]
    x1_flat = x1.reshape(batch, -1)          # same as torch .reshape(B, -1)
    x2_flat = x2.reshape(batch, -1)
    flat_dim = x1_flat.shape[1]
    d2 = x2_flat.shape[1]
    hidden = w1.shape[0]

    in_dtype = jnp.bfloat16 if use_bf16 else jnp.float32
    sub = 16 if use_bf16 else 8              # sublane packing granularity
    isz = 2 if use_bf16 else 4

    # ---- hidden (N) padding & tiling ---------------------------------------
    if tn is not None:
        h_pad = _round_up(hidden, tn)
    elif hidden >= 96:
        h_pad = _round_up(hidden, 128)       # lane-dense output stores
        if h_pad <= 512:
            tn = h_pad
        elif h_pad % 512 == 0:
            tn = 512
        elif h_pad % 256 == 0:
            tn = 256
        else:
            tn = 128
    else:
        h_pad = hidden                       # tiny hidden: full-dim block
        tn = hidden

    # ---- batch (M) tiling ---------------------------------------------------
    if tm is None:
        tm = min(_round_up(batch, sub), 512)
        if batch >= 2 * sub:                 # keep >= 2 parallel batch blocks (v7x)
            tm = min(tm, _round_up((batch + 1) // 2, sub))
    b_pad = _round_up(batch, tm)

    # ---- d2 padding (lane-dense branch-2 blocks) ----------------------------
    d2p = max(128, _round_up(d2, 128))

    # ---- VMEM-budget-derived K tiling ---------------------------------------
    vmem_cap = _vmem_capacity_bytes()
    budget = int(0.75 * vmem_cap)
    fixed = (2 * tm * d2p * isz              # x2 (double-buffered)
             + 2 * tn * d2p * isz            # w2
             + 2 * 2 * tn * 4                # b1, b2 (f32)
             + 2 * 2 * tm * tn * 4           # o1, o2 (f32)
             + tm * tn * 4)                  # acc scratch
    per_tk = 2 * (tm + tn) * isz             # x1 + w1 bytes per K element
    max_tk = max(128, (budget - fixed - (4 << 20)) // per_tk)
    if tk is None:
        if flat_dim <= max_tk:
            tk = flat_dim                    # full-K block, no padded x1 copy
        else:
            tk = min((max_tk // 128) * 128, 8192)
    est = fixed + per_tk * tk
    vmem_limit = int(min(max(budget, est + (8 << 20)), int(0.9 * vmem_cap)))

    k_pad = flat_dim if tk == flat_dim else _round_up(flat_dim, tk)

    # ---- zero padding (contributes nothing to the contractions) -------------
    if b_pad != batch:
        x1_flat = jnp.pad(x1_flat, ((0, b_pad - batch), (0, 0)))
        x2_flat = jnp.pad(x2_flat, ((0, b_pad - batch), (0, 0)))
    if k_pad != flat_dim:
        x1_flat = jnp.pad(x1_flat, ((0, 0), (0, k_pad - flat_dim)))
        w1 = jnp.pad(w1, ((0, 0), (0, k_pad - flat_dim)))
    if h_pad != hidden:
        w1 = jnp.pad(w1, ((0, h_pad - hidden), (0, 0)))
        w2 = jnp.pad(w2, ((0, h_pad - hidden), (0, 0)))
        b1 = jnp.pad(b1, (0, h_pad - hidden))
        b2 = jnp.pad(b2, (0, h_pad - hidden))
    if d2p != d2:
        x2_flat = jnp.pad(x2_flat, ((0, 0), (0, d2p - d2)))
        w2 = jnp.pad(w2, ((0, 0), (0, d2p - d2)))

    x1_flat = x1_flat.astype(in_dtype)
    x2_flat = x2_flat.astype(in_dtype)
    w1 = w1.astype(in_dtype)
    w2 = w2.astype(in_dtype)
    b1_row = b1.reshape(1, h_pad).astype(jnp.float32)
    b2_row = b2.reshape(1, h_pad).astype(jnp.float32)

    grid = (b_pad // tm, h_pad // tn, k_pad // tk)
    out_sds = jax.ShapeDtypeStruct((b_pad, h_pad), jnp.float32)

    # TODO(synk): on v5e, sweep pipeline_mode=pl.Buffered(3) on the x1 / w1
    #             BlockSpecs if a profile shows exposed DMA.
    o1, o2 = pl.pallas_call(
        _mlp_base2_kernel,
        out_shape=(out_sds, out_sds),
        grid=grid,
        in_specs=[
            pl.BlockSpec((tm, tk), lambda i, n, k: (i, k)),    # x1 tile
            pl.BlockSpec((tn, tk), lambda i, n, k: (n, k)),    # w1 tile (torch layout)
            pl.BlockSpec((1, tn), lambda i, n, k: (0, n)),     # b1
            pl.BlockSpec((tm, d2p), lambda i, n, k: (i, 0)),   # x2 (resident over k)
            pl.BlockSpec((tn, d2p), lambda i, n, k: (n, 0)),   # w2 (resident over k)
            pl.BlockSpec((1, tn), lambda i, n, k: (0, n)),     # b2
        ],
        out_specs=(
            pl.BlockSpec((tm, tn), lambda i, n, k: (i, n)),    # branch-1 half
            pl.BlockSpec((tm, tn), lambda i, n, k: (i, n)),    # branch-2 half
        ),
        scratch_shapes=[pltpu.VMEM((tm, tn), jnp.float32)],
        compiler_params=pltpu.CompilerParams(
            dimension_semantics=("parallel", "parallel", "arbitrary"),
            vmem_limit_bytes=vmem_limit),
    )(x1_flat, w1, b1_row, x2_flat, w2, b2_row)

    # Free layout plumbing: drop padding, place the two halves side by side.
    return jnp.concatenate([o1[:batch, :hidden], o2[:batch, :hidden]], axis=-1)


def _init_linear(key, out_features, in_features):
    # Deterministic init mimicking nn.Linear default: U(-1/sqrt(fan_in), +1/sqrt(fan_in))
    kw, kb = jax.random.split(key)
    bound = 1.0 / jnp.sqrt(jnp.float32(in_features))
    w = jax.random.uniform(kw, (out_features, in_features), jnp.float32, -bound, bound)
    b = jax.random.uniform(kb, (out_features,), jnp.float32, -bound, bound)
    return w, b


def _reference(x1, x2, w1, b1, w2, b2, cast=None):
    batch = x1.shape[0]
    x1f = x1.reshape(batch, -1)
    x2f = x2.reshape(batch, -1)
    if cast is not None:  # mimic the kernel's input rounding (bf16 operands)
        x1f = x1f.astype(cast).astype(jnp.float32)
        x2f = x2f.astype(cast).astype(jnp.float32)
        w1 = w1.astype(cast).astype(jnp.float32)
        w2 = w2.astype(cast).astype(jnp.float32)
    r1 = jnp.matmul(x1f, w1.T, precision=lax.Precision.HIGHEST) + b1
    r2 = jnp.matmul(x2f, w2.T, precision=lax.Precision.HIGHEST) + b2
    r1 = jnp.maximum(r1, NEG_SLOPE * r1)
    r2 = jnp.maximum(r2, NEG_SLOPE * r2)
    return jnp.concatenate([r1, r2], axis=-1)


if __name__ == "__main__":
    key = jax.random.PRNGKey(0)
    keys = jax.random.split(key, 8)

    # Small shapes consistent with the module's forward.
    batch = 2
    obs_shape = (4, 8, 8)            # input_dim1_shape -> flat_dim = 256
    input_dim2 = 16
    hidden_dim = 32

    flat_dim = 1
    for s in obs_shape:
        flat_dim *= s

    x1 = jax.random.normal(keys[0], (batch,) + obs_shape, jnp.float32)
    x2 = jax.random.normal(keys[1], (batch, input_dim2), jnp.float32)
    w1, b1 = _init_linear(keys[2], hidden_dim, flat_dim)       # fc1
    w2, b2 = _init_linear(keys[3], hidden_dim, input_dim2)     # fc1_2

    # 1) Default bf16-operand path (f32 accumulate) vs bf16-rounded-input ref.
    out = jax.block_until_ready(mlp_base2_forward(x1, x2, w1, b1, w2, b2))
    ref_bf = _reference(x1, x2, w1, b1, w2, b2, cast=jnp.bfloat16)
    assert out.shape == (batch, 2 * hidden_dim)
    assert jnp.allclose(out, ref_bf, atol=2e-3, rtol=2e-3)

    # 2) f32 path, tight tolerance.
    out_f32 = jax.block_until_ready(
        mlp_base2_forward(x1, x2, w1, b1, w2, b2, use_bf16=False))
    ref_f32 = _reference(x1, x2, w1, b1, w2, b2)
    assert jnp.allclose(out_f32, ref_f32, atol=1e-4, rtol=1e-4)

    # 3) Non-multiple-of-tile batch with forced small tiles: exercises batch
    #    padding, the K-axis accumulator, and multiple grid steps.
    batch_b = 12
    x1_b = jax.random.normal(keys[4], (batch_b,) + obs_shape, jnp.float32)
    x2_b = jax.random.normal(keys[5], (batch_b, input_dim2), jnp.float32)
    out_b = jax.block_until_ready(
        mlp_base2_forward(x1_b, x2_b, w1, b1, w2, b2, tm=16, tk=128))
    ref_b = _reference(x1_b, x2_b, w1, b1, w2, b2, cast=jnp.bfloat16)
    assert out_b.shape == (batch_b, 2 * hidden_dim)
    assert jnp.allclose(out_b, ref_b, atol=2e-3, rtol=2e-3)

    # 4) Larger hidden: exercises the N (hidden) grid axis and lane-dense tiles.
    hidden_c = 256
    w1_c, b1_c = _init_linear(keys[6], hidden_c, flat_dim)
    w2_c, b2_c = _init_linear(keys[7], hidden_c, input_dim2)
    out_c = jax.block_until_ready(
        mlp_base2_forward(x1_b, x2_b, w1_c, b1_c, w2_c, b2_c,
                          tm=16, tn=128, tk=128))
    ref_c = _reference(x1_b, x2_b, w1_c, b1_c, w2_c, b2_c, cast=jnp.bfloat16)
    assert out_c.shape == (batch_b, 2 * hidden_c)
    assert jnp.allclose(out_c, ref_c, atol=2e-3, rtol=2e-3)

    print("KERNEL_OK")
</pallas_src>

<mosaic_0001>
module attributes {stable_mosaic.version = 11 : i64} {
  func.func @_mlp_base2_kernel(%arg0: i32, %arg1: i32, %arg2: i32, %arg3: memref<16x256xbf16, #tpu.memory_space<vmem>>, %arg4: memref<32x256xbf16, #tpu.memory_space<vmem>>, %arg5: memref<1x32xf32, #tpu.memory_space<vmem>>, %arg6: memref<16x128xbf16, #tpu.memory_space<vmem>>, %arg7: memref<32x128xbf16, #tpu.memory_space<vmem>>, %arg8: memref<1x32xf32, #tpu.memory_space<vmem>>, %arg9: memref<16x32xf32, #tpu.memory_space<vmem>>, %arg10: memref<16x32xf32, #tpu.memory_space<vmem>>, %arg11: memref<16x32xf32, #tpu.memory_space<vmem>>) attributes {dimension_semantics = [#tpu.dimension_semantics<parallel>, #tpu.dimension_semantics<parallel>, #tpu.dimension_semantics<arbitrary>], iteration_bounds = array<i64: 1, 1, 1>, scalar_prefetch = 0 : i64, scratch_operands = 1 : i64, tpu.core_type = #tpu.core_type<tc>, window_params = [{transform_indices = @transform_0, window_bounds = array<i64: 16, 256>}, {transform_indices = @transform_1, window_bounds = array<i64: 32, 256>}, {transform_indices = @transform_2, window_bounds = array<i64: 1, 32>}, {transform_indices = @transform_3, window_bounds = array<i64: 16, 128>}, {transform_indices = @transform_4, window_bounds = array<i64: 32, 128>}, {transform_indices = @transform_5, window_bounds = array<i64: 1, 32>}, {transform_indices = @transform_6, window_bounds = array<i64: 16, 32>}, {transform_indices = @transform_7, window_bounds = array<i64: 16, 32>}]} {
    %c0_i32 = arith.constant 0 : i32
    %0 = arith.cmpi eq, %arg2, %c0_i32 : i32
    %1 = arith.extui %0 : i1 to i32
    %c0_i32_0 = arith.constant 0 : i32
    %2 = arith.cmpi ne, %1, %c0_i32_0 : i32
    scf.if %2 {
      %cst_10 = arith.constant 0.000000e+00 : f32
      %12 = vector.broadcast %cst_10 : f32 to vector<16x32xf32>
      %c0_11 = arith.constant 0 : index
      %c0_12 = arith.constant 0 : index
      %13 = vector.load %arg11[%c0_11, %c0_12] : memref<16x32xf32, #tpu.memory_space<vmem>>, vector<16x32xf32>
      tpu.vector_store %arg11[%c0_11, %c0_12], %12 {strides = array<i32>} : memref<16x32xf32, #tpu.memory_space<vmem>>, vector<16x32xf32>,
    } else {
    }
    %c0 = arith.constant 0 : index
    %c0_1 = arith.constant 0 : index
    %3 = vector.load %arg11[%c0, %c0_1] : memref<16x32xf32, #tpu.memory_space<vmem>>, vector<16x32xf32>
    %c0_2 = arith.constant 0 : index
    %c0_3 = arith.constant 0 : index
    %4 = vector.load %arg3[%c0_2, %c0_3] : memref<16x256xbf16, #tpu.memory_space<vmem>>, vector<16x256xbf16>
    %c0_4 = arith.constant 0 : index
    %c0_5 = arith.constant 0 : index
    %5 = vector.load %arg4[%c0_4, %c0_5] : memref<32x256xbf16, #tpu.memory_space<vmem>>, vector<32x256xbf16>
    %cst = arith.constant dense<0.000000e+00> : vector<16x32xf32>
    %6 = tpu.matmul %4, %5, %cst {dimension_numbers = #tpu.dot_dimension_numbers<[1], [1], [0], [0], [0, 0, 1, 0], [], []>} : vector<16x256xbf16>, vector<32x256xbf16>, vector<16x32xf32> -> vector<16x32xf32>
    %7 = arith.addf %3, %6 : vector<16x32xf32>
    %c0_6 = arith.constant 0 : index
    %c0_7 = arith.constant 0 : index
    %8 = vector.load %arg11[%c0_6, %c0_7] : memref<16x32xf32, #tpu.memory_space<vmem>>, vector<16x32xf32>
    tpu.vector_store %arg11[%c0_6, %c0_7], %7 {strides = array<i32>} : memref<16x32xf32, #tpu.memory_space<vmem>>, vector<16x32xf32>,
    %c0_i32_8 = arith.constant 0 : i32
    %9 = arith.cmpi eq, %arg2, %c0_i32_8 : i32
    %10 = arith.extui %9 : i1 to i32
    %c0_i32_9 = arith.constant 0 : i32
    %11 = arith.cmpi ne, %10, %c0_i32_9 : i32
    scf.if %11 {
      %c0_10 = arith.constant 0 : index
      %c0_11 = arith.constant 0 : index
      %12 = vector.load %arg11[%c0_10, %c0_11] : memref<16x32xf32, #tpu.memory_space<vmem>>, vector<16x32xf32>
      %c0_12 = arith.constant 0 : index
      %c0_13 = arith.constant 0 : index
      %13 = vector.load %arg5[%c0_12, %c0_13] : memref<1x32xf32, #tpu.memory_space<vmem>>, vector<1x32xf32>
      %14 = vector.broadcast %13 : vector<1x32xf32> to vector<16x32xf32>
      %15 = arith.addf %12, %14 : vector<16x32xf32>
      %cst_14 = arith.constant 0.00999999977 : f32
      %16 = vector.broadcast %cst_14 : f32 to vector<16x32xf32>
      %17 = arith.mulf %16, %15 : vector<16x32xf32>
      %18 = arith.maximumf %15, %17 : vector<16x32xf32>
      %c0_15 = arith.constant 0 : index
      %c0_16 = arith.constant 0 : index
      %19 = vector.load %arg9[%c0_15, %c0_16] : memref<16x32xf32, #tpu.memory_space<vmem>>, vector<16x32xf32>
      tpu.vector_store %arg9[%c0_15, %c0_16], %18 {strides = array<i32>} : memref<16x32xf32, #tpu.memory_space<vmem>>, vector<16x32xf32>,
      %c0_17 = arith.constant 0 : index
      %c0_18 = arith.constant 0 : index
      %20 = vector.load %arg6[%c0_17, %c0_18] : memref<16x128xbf16, #tpu.memory_space<vmem>>, vector<16x128xbf16>
      %c0_19 = arith.constant 0 : index
      %c0_20 = arith.constant 0 : index
      %21 = vector.load %arg7[%c0_19, %c0_20] : memref<32x128xbf16, #tpu.memory_space<vmem>>, vector<32x128xbf16>
      %cst_21 = arith.constant dense<0.000000e+00> : vector<16x32xf32>
      %22 = tpu.matmul %20, %21, %cst_21 {dimension_numbers = #tpu.dot_dimension_numbers<[1], [1], [0], [0], [0, 0, 1, 0], [], []>} : vector<16x128xbf16>, vector<32x128xbf16>, vector<16x32xf32> -> vector<16x32xf32>
      %c0_22 = arith.constant 0 : index
      %c0_23 = arith.constant 0 : index
      %23 = vector.load %arg8[%c0_22, %c0_23] : memref<1x32xf32, #tpu.memory_space<vmem>>, vector<1x32xf32>
      %24 = vector.broadcast %23 : vector<1x32xf32> to vector<16x32xf32>
      %25 = arith.addf %22, %24 : vector<16x32xf32>
      %cst_24 = arith.constant 0.00999999977 : f32
      %26 = vector.broadcast %cst_24 : f32 to vector<16x32xf32>
      %27 = arith.mulf %26, %25 : vector<16x32xf32>
      %28 = arith.maximumf %25, %27 : vector<16x32xf32>
      %c0_25 = arith.constant 0 : index
      %c0_26 = arith.constant 0 : index
      %29 = vector.load %arg10[%c0_25, %c0_26] : memref<16x32xf32, #tpu.memory_space<vmem>>, vector<16x32xf32>
      tpu.vector_store %arg10[%c0_25, %c0_26], %28 {strides = array<i32>} : memref<16x32xf32, #tpu.memory_space<vmem>>, vector<16x32xf32>,
    } else {
    }
    return
  }
  func.func @transform_0(%arg0: i32, %arg1: i32, %arg2: i32) -> (i32, i32) {
    %c0_i32 = arith.constant 0 : i32
    return %arg0, %arg2 : i32, i32
  }
  func.func @transform_1(%arg0: i32, %arg1: i32, %arg2: i32) -> (i32, i32) {
    %c0_i32 = arith.constant 0 : i32
    return %arg1, %arg2 : i32, i32
  }
  func.func @transform_2(%arg0: i32, %arg1: i32, %arg2: i32) -> (i32, i32) {
    %c0_i32 = arith.constant 0 : i32
    %c0_i32_0 = arith.constant 0 : i32
    return %c0_i32, %arg1 : i32, i32
  }
  func.func @transform_3(%arg0: i32, %arg1: i32, %arg2: i32) -> (i32, i32) {
    %c0_i32 = arith.constant 0 : i32
    %c0_i32_0 = arith.constant 0 : i32
    return %arg0, %c0_i32 : i32, i32
  }
  func.func @transform_4(%arg0: i32, %arg1: i32, %arg2: i32) -> (i32, i32) {
    %c0_i32 = arith.constant 0 : i32
    %c0_i32_0 = arith.constant 0 : i32
    return %arg1, %c0_i32 : i32, i32
  }
  func.func @transform_5(%arg0: i32, %arg1: i32, %arg2: i32) -> (i32, i32) {
    %c0_i32 = arith.constant 0 : i32
    %c0_i32_0 = arith.constant 0 : i32
    return %c0_i32, %arg1 : i32, i32
  }
  func.func @transform_6(%arg0: i32, %arg1: i32, %arg2: i32) -> (i32, i32) {
    %c0_i32 = arith.constant 0 : i32
    return %arg0, %arg1 : i32, i32
  }
  func.func @transform_7(%arg0: i32, %arg1: i32, %arg2: i32) -> (i32, i32) {
    %c0_i32 = arith.constant 0 : i32
    return %arg0, %arg1 : i32, i32
  }
}

</mosaic_0001>

<llo_original>
// kernel: tpu_custom_call.1
$region0: #{tpu_custom_call.1}
  #allocation0 [shape = 'u32[]', space=smem, size = 0x4, offset = 0x4, fixed_abs, tag = 'smem constant byte address 0x4 - core index']
  #allocation1 [shape = 'u32[144,128]{1,0:T(1,128)}', space=vmem, size = 0x12000, scoped, tag = 'internal scratch']
  #allocation2 [shape = 'f32[16,32]{1,0:T(8,128)}', space=vmem, size = 0x2000, scoped, tag = 'scratch operand']
  %s0 = inlined_call_operand.hbm [shape: bf16[16,256], index: 0, kind: input, shape index: {}]
  %s1 = inlined_call_operand.hbm [shape: bf16[32,256], index: 1, kind: input, shape index: {}]
  %s2 = inlined_call_operand.vmem [shape: f32[1,32], index: 2, kind: input, shape index: {}]
  %s3 = inlined_call_operand.hbm [shape: bf16[16,128], index: 3, kind: input, shape index: {}]
  %s4 = inlined_call_operand.hbm [shape: bf16[32,128], index: 4, kind: input, shape index: {}]
  %s5 = inlined_call_operand.vmem [shape: f32[1,32], index: 5, kind: input, shape index: {}]
  %s6 = inlined_call_operand.hbm [shape: f32[16,32], index: 6, kind: output, shape index: {0}]
  %s7 = inlined_call_operand.hbm [shape: f32[16,32], index: 7, kind: output, shape index: {1}]
  %8 = xla_tuple %s6, %s7
  %s9 = sld [smem:[#allocation0]]
  $region66: #{tpu_custom_call.1} parent=0
    _
  %s11 = ssub.s32 1, %s9
  %s12 = scalar_select 0, %s11, %s9
  $region1: #{tpu_custom_call.1} parent=0
    #allocation3 [shape = 'u8[8192]{0}', space=vmem, size = 0x2000, scoped, tag = 'input window, operand 0, single buffered']
    #allocation4 [shape = 's32[1]{0}', space=sflag, size = 0x4, scoped, tag = 'scoped memory for tpu_custom_call.1']
    #allocation5 [shape = 's32[1]{0}', space=sflag, size = 0x4, scoped, tag = 'scoped memory for tpu_custom_call.1']
    #allocation6 [shape = 'u8[16384]{0}', space=vmem, size = 0x4000, scoped, tag = 'input window, operand 1, single buffered']
    #allocation7 [shape = 's32[1]{0}', space=sflag, size = 0x4, scoped, tag = 'scoped memory for tpu_custom_call.1']
    #allocation8 [shape = 'u8[4096]{0}', space=vmem, size = 0x1000, scoped, tag = 'input window, operand 3, single buffered']
    #allocation9 [shape = 'u8[8192]{0}', space=vmem, size = 0x2000, scoped, tag = 'input window, operand 4, single buffered']
    #allocation10 [shape = 's32[1]{0}', space=sflag, size = 0x4, scoped, tag = 'scoped memory for tpu_custom_call.1']
    #allocation11 [shape = 'u8[8192]{0}', space=vmem, size = 0x2000, scoped, tag = 'output window, operand 0, single buffered']
    #allocation12 [shape = 'u8[8192]{0}', space=vmem, size = 0x2000, scoped, tag = 'output window, operand 1, single buffered']
    #allocation13 [shape = 's32[1]{0}', space=sflag, size = 0x4, scoped, tag = 'scoped memory for tpu_custom_call.1']
    %13 = vsyncpa [#allocation4], 0
    %14 = vsyncpa [#allocation7], 0
    %15 = vsyncpa [#allocation10], 0
    %16 = vsyncpa [#allocation5], 0
    %17 = vsyncpa [#allocation13], 0
    // Predicated region
    $region2: #{tpu_custom_call.1} parent=1 // pred_check
      _
    $region3: #{tpu_custom_call.1} parent=1 // pred_check_branch
      %19 = sbr.rel (0) target = $region5
    $region4: #{tpu_custom_call.1} parent=1 // pred_region
      %s21 = ssub.s32 256, 256
      %22 = vsyncadd [#allocation4], %s21
      %s23 = sshll.u32 [#allocation3], 4
      %s24 = int_to_ptr.vmem [resolvable:$true] %s23
      %29 = dma.hbm_to_vmem [thread:$0]  %s0, 256, %s24, [#allocation4], 128, 128, 8
    $region5: #{tpu_custom_call.1} parent=1 // pred_fallthru
      _
    // Predicated region
    $region6: #{tpu_custom_call.1} parent=1 // pred_check
      _
    $region7: #{tpu_custom_call.1} parent=1 // pred_check_branch
      %31 = sbr.rel (0) target = $region9
    $region8: #{tpu_custom_call.1} parent=1 // pred_region
      %s33 = ssub.s32 512, 512
      %34 = vsyncadd [#allocation7], %s33
      %s35 = sshll.u32 [#allocation6], 4
      %s36 = int_to_ptr.vmem [resolvable:$true] %s35
      %41 = dma.hbm_to_vmem [thread:$0]  %s1, 512, %s36, [#allocation7], 128, 128, 8
    $region9: #{tpu_custom_call.1} parent=1 // pred_fallthru
      _
    // Predicated region
    $region10: #{tpu_custom_call.1} parent=1 // pred_check
      _
    $region11: #{tpu_custom_call.1} parent=1 // pred_check_branch
      %43 = sbr.rel (0) target = $region13
    $region12: #{tpu_custom_call.1} parent=1 // pred_region
      _
    $region13: #{tpu_custom_call.1} parent=1 // pred_fallthru
      _
    // Predicated region
    $region14: #{tpu_custom_call.1} parent=1 // pred_check
      _
    $region15: #{tpu_custom_call.1} parent=1 // pred_check_branch
      %45 = sbr.rel (0) target = $region17
    $region16: #{tpu_custom_call.1} parent=1 // pred_region
      %s47 = ssub.s32 128, 128
      %48 = vsyncadd [#allocation7], %s47
      %s49 = sshll.u32 [#allocation8], 4
      %s50 = int_to_ptr.vmem [resolvable:$true] %s49
      %55 = dma.hbm_to_vmem [thread:$0]  %s3, 128, %s50, [#allocation7], 64, 64, 4
    $region17: #{tpu_custom_call.1} parent=1 // pred_fallthru
      _
    // Predicated region
    $region18: #{tpu_custom_call.1} parent=1 // pred_check
      _
    $region19: #{tpu_custom_call.1} parent=1 // pred_check_branch
      %57 = sbr.rel (0) target = $region21
    $region20: #{tpu_custom_call.1} parent=1 // pred_region
      %s59 = ssub.s32 256, 256
      %60 = vsyncadd [#allocation10], %s59
      %s61 = sshll.u32 [#allocation9], 4
      %s62 = int_to_ptr.vmem [resolvable:$true] %s61
      %67 = dma.hbm_to_vmem [thread:$0]  %s4, 256, %s62, [#allocation10], 64, 64, 4
    $region21: #{tpu_custom_call.1} parent=1 // pred_fallthru
      _
    // Predicated region
    $region22: #{tpu_custom_call.1} parent=1 // pred_check
      _
    $region23: #{tpu_custom_call.1} parent=1 // pred_check_branch
      %69 = sbr.rel (0) target = $region25
    $region24: #{tpu_custom_call.1} parent=1 // pred_region
      _
    $region25: #{tpu_custom_call.1} parent=1 // pred_fallthru
      _
    // Predicated region
    $region26: #{tpu_custom_call.1} parent=1 // pred_check
      _
    $region27: #{tpu_custom_call.1} parent=1 // pred_check_branch
      %71 = sbr.rel (0) target = $region29
    $region28: #{tpu_custom_call.1} parent=1 // pred_region
      %72 = dma.done [#allocation4], 256
    $region29: #{tpu_custom_call.1} parent=1 // pred_fallthru
      _
    // Predicated region
    $region30: #{tpu_custom_call.1} parent=1 // pred_check
      _
    $region31: #{tpu_custom_call.1} parent=1 // pred_check_branch
      %74 = sbr.rel (0) target = $region33
    $region32: #{tpu_custom_call.1} parent=1 // pred_region
      %75 = dma.done [#allocation7], 512
    $region33: #{tpu_custom_call.1} parent=1 // pred_fallthru
      _
    // Predicated region
    $region34: #{tpu_custom_call.1} parent=1 // pred_check
      _
    $region35: #{tpu_custom_call.1} parent=1 // pred_check_branch
      %77 = sbr.rel (0) target = $region37
    $region36: #{tpu_custom_call.1} parent=1 // pred_region
      %78 = dma.done [#allocation7], 128
    $region37: #{tpu_custom_call.1} parent=1 // pred_fallthru
      _
    // Predicated region
    $region38: #{tpu_custom_call.1} parent=1 // pred_check
      _
    $region39: #{tpu_custom_call.1} parent=1 // pred_check_branch
      %80 = sbr.rel (0) target = $region41
    $region40: #{tpu_custom_call.1} parent=1 // pred_region
      %81 = dma.done [#allocation10], 256
    $region41: #{tpu_custom_call.1} parent=1 // pred_fallthru
      _
    %p83 = scmp.eq.s32.totalorder 0, 0
    // Predicated region
    $region42: #{tpu_custom_call.1} parent=1 // pred_check
      %p84 = pneg %p83
    $region43: #{tpu_custom_call.1} parent=1 // pred_check_branch
      %86 = sbr.rel (%p84) target = $region45
    $region44: #{tpu_custom_call.1} parent=1 // pred_region
      %vm87 = vcmask 261120
      %88 = vst.msk [vmem:[#allocation2] sm:$0xff] %vm87, 0.0
      %89 = vst.msk [vmem:[#allocation2 + $0x8] sm:$0xff] %vm87, 0.0
    $region45: #{tpu_custom_call.1} parent=1 // pred_fallthru
      _
    %v90 = vld [vmem:[#allocation2] sm:$0xff]
    %v91 = vld [vmem:[#allocation2 + $0x8] sm:$0xff]
    %v92 = vld [vmem:[#allocation3] sm:$0xff]
    %v93 = vld [vmem:[#allocation3 + $0x8] sm:$0xff]
    %v94 = vld [vmem:[#allocation6] sm:$0xff]
    %v95 = vld [vmem:[#allocation6 + $0x8] sm:$0xff]
    %v96 = vld [vmem:[#allocation6 + $0x10] sm:$0xff]
    %v97 = vld [vmem:[#allocation6 + $0x18] sm:$0xff]
    %v100 = vunpack.c.l.b16 %v92
    %v101 = vunpack.c.h.b16 %v92
    %v102 = vunpack.c.l.b16 %v93
    %v103 = vunpack.c.h.b16 %v93
    %v104 = vpack.c.b16 %v102, %v100
    %v105 = vpack.c.b16 %v103, %v101
    %v112 = vunpack.c.l.b16 %v94
    %v113 = vunpack.c.h.b16 %v94
    %v114 = vunpack.c.l.b16 %v95
    %v115 = vunpack.c.h.b16 %v95
    %v116 = vunpack.c.l.b16 %v96
    %v117 = vunpack.c.h.b16 %v96
    %v118 = vunpack.c.l.b16 %v97
    %v119 = vunpack.c.h.b16 %v97
    %v120 = vpack.c.b16 %v114, %v112
    %v121 = vpack.c.b16 %v115, %v113
    %v122 = vpack.c.b16 %v118, %v116
    %v123 = vpack.c.b16 %v119, %v117
    %128 = vmatprep.subr.bf16.mxu0 0
    %129 = vmatpush1.bf16.xpose.msra.mxu0 0
    %130 = vmatprep.subr.bf16.mxu0 0
    %131 = vmatpush1.bf16.xpose.msra.mxu0 0
    %132 = vmatprep.subr.bf16.mxu0 0
    %133 = vmatpush1.bf16.xpose.msra.mxu0 0
    %134 = vmatprep.subr.bf16.mxu0 0
    %135 = vmatpush1.bf16.xpose.msra.mxu0 0
    %136 = vmatprep.subr.bf16.mxu0 0
    %137 = vmatpush1.bf16.xpose.msra.mxu0 0
    %138 = vmatprep.subr.bf16.mxu0 0
    %139 = vmatpush1.bf16.xpose.msra.mxu0 0
    %140 = vmatprep.subr.bf16.mxu0 %v123
    %141 = vmatpush1.bf16.xpose.msra.mxu0 %v122
    %142 = vmatprep.subr.bf16.mxu0 %v121
    %143 = vmatpush1.bf16.xpose.msra.mxu0 %v120
    %144 = vmatprep.subr.bf16.mxu0 0
    %145 = vmatpush2.bf16.xpose.msra.mxu0 0
    %146 = vmatprep.subr.bf16.mxu0 0
    %147 = vmatpush2.bf16.xpose.msra.mxu0 0
    %148 = vmatprep.subr.bf16.mxu0 0
    %149 = vmatpush2.bf16.xpose.msra.mxu0 0
    %150 = vmatprep.subr.bf16.mxu0 0
    %151 = vmatpush2.bf16.xpose.msra.mxu0 0
    %152 = vmatprep.subr.bf16.mxu0 0
    %153 = vmatpush2.bf16.xpose.msra.mxu0 0
    %154 = vmatprep.subr.bf16.mxu0 0
    %155 = vmatpush2.bf16.xpose.msra.mxu0 0
    %156 = vmatprep.subr.bf16.mxu0 0
    %157 = vmatpush2.bf16.xpose.msra.mxu0 0
    %158 = vmatprep.subr.bf16.mxu0 0
    %159 = vmatpush2.bf16.xpose.msra.mxu0 0
    %160 = vmatprep.mubr.bf16.mxu0 %v105
    %161 = vmatmul.mubr.bf16.gmra.mxu0 %v104
    %v162 = vpop.f32.mrf.mxu0
    %v163 = vadd.f32 0.0, %v162
    %v164 = vpop.f32.mrf.mxu0
    %v165 = vpop.f32.mrf.mxu0
    %v166 = vadd.f32 0.0, %v165
    %v167 = vpop.f32.mrf.mxu0
    %168 = vdwg.mxu0
    %v169 = vadd.f32 %v90, %v163
    %v170 = vadd.f32 %v91, %v166
    %vm171 = vcmask 261120
    %172 = vst.msk [vmem:[#allocation2] sm:$0xff] %vm171, %v169
    %173 = vst.msk [vmem:[#allocation2 + $0x8] sm:$0xff] %vm171, %v170
    // Predicated region
    $region46: #{tpu_custom_call.1} parent=1 // pred_check
      %p174 = pneg %p83
    $region47: #{tpu_custom_call.1} parent=1 // pred_check_branch
      %176 = sbr.rel (%p174) target = $region49
    $region48: #{tpu_custom_call.1} parent=1 // pred_region
      %v177 = vld [vmem:[#allocation2] sm:$0xff]
      %v178 = vld [vmem:[#allocation2 + $0x8] sm:$0xff]
      %v179 = vld [vmem:[%s2] sm:$0x1]
      %v181 = vlaneseq
      %v182 = vshrl.u32 %v181, 7
      %v183 = vsub.s32 0, %v182
      %v184 = vrot.slane %v179, %v183
      %v186 = vadd.f32 %v177, %v184
      %v187 = vadd.f32 %v178, %v184
      %v188 = vmul.f32 %v186, 0.01
      %v189 = vmul.f32 %v187, 0.01
      %v190 = vmax.f32 %v186, %v188
      %v191 = vmax.f32 %v187, %v189
      %192 = vst.msk [vmem:[#allocation11] sm:$0xff] %vm171, %v190
      %193 = vst.msk [vmem:[#allocation11 + $0x8] sm:$0xff] %vm171, %v191
      %v194 = vld [vmem:[#allocation8] sm:$0xf]
      %v195 = vld [vmem:[#allocation8 + $0x4] sm:$0xf]
      %v196 = vld [vmem:[#allocation9] sm:$0xf]
      %v197 = vld [vmem:[#allocation9 + $0x4] sm:$0xf]
      %v198 = vld [vmem:[#allocation9 + $0x8] sm:$0xf]
      %v199 = vld [vmem:[#allocation9 + $0xc] sm:$0xf]
      %v200 = vld [vmem:[%s5] sm:$0x1]
      %v202 = vlaneseq
      %v203 = vshrl.u32 %v202, 7
      %v204 = vsub.s32 0, %v203
      %v205 = vrot.slane %v200, %v204
      %v209 = vunpack.c.l.b16 %v194
      %v210 = vunpack.c.l.b16 %v195
      %v211 = vpack.c.b16 %v210, %v209
      %v217 = vunpack.c.l.b16 %v196
      %v218 = vunpack.c.l.b16 %v197
      %v219 = vunpack.c.l.b16 %v198
      %v220 = vunpack.c.l.b16 %v199
      %v221 = vpack.c.b16 %v218, %v217
      %v222 = vpack.c.b16 %v220, %v219
      %225 = vmatprep.subr.bf16.mxu0 0
      %226 = vmatpush1.bf16.xpose.msra.mxu0 0
      %227 = vmatprep.subr.bf16.mxu0 0
      %228 = vmatpush1.bf16.xpose.msra.mxu0 0
      %229 = vmatprep.subr.bf16.mxu0 0
      %230 = vmatpush1.bf16.xpose.msra.mxu0 0
      %231 = vmatprep.subr.bf16.mxu0 0
      %232 = vmatpush1.bf16.xpose.msra.mxu0 0
      %233 = vmatprep.subr.bf16.mxu0 0
      %234 = vmatpush1.bf16.xpose.msra.mxu0 0
      %235 = vmatprep.subr.bf16.mxu0 0
      %236 = vmatpush1.bf16.xpose.msra.mxu0 0
      %237 = vmatprep.subr.bf16.mxu0 0
      %238 = vmatpush1.bf16.xpose.msra.mxu0 %v222
      %239 = vmatprep.subr.bf16.mxu0 0
      %240 = vmatpush1.bf16.xpose.msra.mxu0 %v221
      %241 = vmatprep.subr.bf16.mxu0 0
      %242 = vmatpush2.bf16.xpose.msra.mxu0 0
      %243 = vmatprep.subr.bf16.mxu0 0
      %244 = vmatpush2.bf16.xpose.msra.mxu0 0
      %245 = vmatprep.subr.bf16.mxu0 0
      %246 = vmatpush2.bf16.xpose.msra.mxu0 0
      %247 = vmatprep.subr.bf16.mxu0 0
      %248 = vmatpush2.bf16.xpose.msra.mxu0 0
      %249 = vmatprep.subr.bf16.mxu0 0
      %250 = vmatpush2.bf16.xpose.msra.mxu0 0
      %251 = vmatprep.subr.bf16.mxu0 0
      %252 = vmatpush2.bf16.xpose.msra.mxu0 0
      %253 = vmatprep.subr.bf16.mxu0 0
      %254 = vmatpush2.bf16.xpose.msra.mxu0 0
      %255 = vmatprep.subr.bf16.mxu0 0
      %256 = vmatpush2.bf16.xpose.msra.mxu0 0
      %257 = vmatprep.mubr.bf16.mxu0 0
      %258 = vmatmul.mubr.bf16.gmra.mxu0 %v211
      %v259 = vpop.f32.mrf.mxu0
      %v260 = vadd.f32 %v205, %v259
      %v261 = vpop.f32.mrf.mxu0
      %v262 = vpop.f32.mrf.mxu0
      %v263 = vadd.f32 %v205, %v262
      %v264 = vpop.f32.mrf.mxu0
      %265 = vdwg.mxu0
      %v266 = vmul.f32 %v260, 0.01
      %v267 = vmul.f32 %v263, 0.01
      %v268 = vmax.f32 %v260, %v266
      %v269 = vmax.f32 %v263, %v267
      %270 = vst.msk [vmem:[#allocation12] sm:$0xff] %vm171, %v268
      %271 = vst.msk [vmem:[#allocation12 + $0x8] sm:$0xff] %vm171, %v269
    $region49: #{tpu_custom_call.1} parent=1 // pred_fallthru
      _
    // Predicated region
    $region50: #{tpu_custom_call.1} parent=1 // pred_check
      _
    $region51: #{tpu_custom_call.1} parent=1 // pred_check_branch
      %273 = sbr.rel (0) target = $region53
    $region52: #{tpu_custom_call.1} parent=1 // pred_region
      %s275 = ssub.s32 256, 256
      %276 = vsyncadd [#allocation5], %s275
      %s277 = sshll.u32 [#allocation11], 4
      %s278 = int_to_ptr.vmem [resolvable:$true] %s277
      %283 = dma.vmem_to_hbm [thread:$0]  %s278, 256, %s6, [#allocation5], 128, 128, 8
    $region53: #{tpu_custom_call.1} parent=1 // pred_fallthru
      _
    // Predicated region
    $region54: #{tpu_custom_call.1} parent=1 // pred_check
      _
    $region55: #{tpu_custom_call.1} parent=1 // pred_check_branch
      %285 = sbr.rel (0) target = $region57
    $region56: #{tpu_custom_call.1} parent=1 // pred_region
      %s287 = ssub.s32 256, 256
      %288 = vsyncadd [#allocation13], %s287
      %s289 = sshll.u32 [#allocation12], 4
      %s290 = int_to_ptr.vmem [resolvable:$true] %s289
      %295 = dma.vmem_to_hbm [thread:$0]  %s290, 256, %s7, [#allocation13], 128, 128, 8
    $region57: #{tpu_custom_call.1} parent=1 // pred_fallthru
      _
    // Predicated region
    $region58: #{tpu_custom_call.1} parent=1 // pred_check
      _
    $region59: #{tpu_custom_call.1} parent=1 // pred_check_branch
      %297 = sbr.rel (0) target = $region61
    $region60: #{tpu_custom_call.1} parent=1 // pred_region
      %298 = dma.done [#allocation5], 256
    $region61: #{tpu_custom_call.1} parent=1 // pred_fallthru
      _
    // Predicated region
    $region62: #{tpu_custom_call.1} parent=1 // pred_check
      _
    $region63: #{tpu_custom_call.1} parent=1 // pred_check_branch
      %300 = sbr.rel (0) target = $region65
    $region64: #{tpu_custom_call.1} parent=1 // pred_region
      %301 = dma.done [#allocation13], 256
    $region65: #{tpu_custom_call.1} parent=1 // pred_fallthru
      _
    %302 = vsyncpa [#allocation4], 1
    %303 = vsyncpa [#allocation7], 1
    %304 = vsyncpa [#allocation10], 1
    %305 = vsyncpa [#allocation5], 1
    %306 = vsyncpa [#allocation13], 1

</llo_original>
